<compile_context>
chip_gen: v7x
topology: tpu7x:2x2x1
jax: 0.10.0
libtpu: 0.0.40
codegen_flags: <defaults>
</compile_context>

<pallas_src>
from functools import partial

import jax
import jax.numpy as jnp
from jax.experimental import pallas as pl
from jax.experimental.pallas import tpu as pltpu


# ----------------------------- kernel ------------------------------------- #
def mlp_kernel(x_ref,
               w1_ref, b1_ref,
               w2_ref, b2_ref,
               w3_ref, b3_ref,
               w4_ref, b4_ref,
               out_ref):
    cd = w1_ref.dtype                      # compute dtype (bf16)
    # In-kernel cast of the f32 input tile (hidden under the MXU).
    x = x_ref[...].astype(cd)
    # Layer 1: Linear(in, 64) [+ folded BN] + ReLU  (Dropout = identity, eval)
    h = jnp.maximum(
        jnp.dot(x, w1_ref[...], preferred_element_type=jnp.float32)
        + b1_ref[...], 0.0).astype(cd)
    # Layer 2: Linear(64, 128) [+ folded BN] + ReLU
    h = jnp.maximum(
        jnp.dot(h, w2_ref[...], preferred_element_type=jnp.float32)
        + b2_ref[...], 0.0).astype(cd)
    # Layer 3: Linear(128, 64) [+ folded BN] + ReLU
    h = jnp.maximum(
        jnp.dot(h, w3_ref[...], preferred_element_type=jnp.float32)
        + b3_ref[...], 0.0).astype(cd)
    # Output: Linear(64, num_classes) padded to 128 lanes (dense vst), bf16 store
    out = (jnp.dot(h, w4_ref[...], preferred_element_type=jnp.float32)
           + b4_ref[...])
    out_ref[...] = out.astype(out_ref.dtype)


# ----------------------------- wrapper ------------------------------------ #
def _round_up(n, m):
    return ((n + m - 1) // m) * m


@partial(jax.jit, static_argnames=("num_classes", "tile_b"))
def mlp_forward(x, w1, b1, w2, b2, w3, b3, w4, b4, *, num_classes,
                tile_b=2048):
    """x: [B, input_size] float32. Weights prepared by fold_and_pad_params.

    Returns f32 logits [B, num_classes]; the slice/upcast of the padded bf16
    kernel output stays inside this jit so XLA fuses it (no extra HBM pass).
    """
    B, F = x.shape
    npad = w4.shape[1]

    # Clamp the tile to the (rounded-up) batch; keep a multiple of 16 so bf16
    # sublane packing of the output tile stays legal. Small batches -> grid=1.
    # For v7x (2 TensorCores) pass a smaller tile_b so the grid is >= 2.
    tile_b = max(16, min(tile_b, _round_up(B, 16)))
    tile_b = _round_up(tile_b, 16)
    B_pad = _round_up(B, tile_b)
    grid = (B_pad // tile_b,)

    x_pad = x if B_pad == B else jnp.pad(x, ((0, B_pad - B), (0, 0)))

    weight_args = (w1, b1, w2, b2, w3, b3, w4, b4)

    def full(arr):  # whole-array block, constant index map -> weights resident
        return pl.BlockSpec(arr.shape, lambda i: (0,) * arr.ndim)

    in_specs = ([pl.BlockSpec((tile_b, F), lambda i: (i, 0))]
                + [full(a) for a in weight_args])
    out_spec = pl.BlockSpec((tile_b, npad), lambda i: (i, 0))

    flops = 2 * B_pad * (F * 64 + 64 * 128 + 128 * 64 + 64 * npad)
    bytes_accessed = (x_pad.size * x_pad.dtype.itemsize
                      + sum(a.size * a.dtype.itemsize for a in weight_args)
                      + B_pad * npad * 2)  # bf16 output

    out = pl.pallas_call(
        mlp_kernel,
        out_shape=jax.ShapeDtypeStruct((B_pad, npad), jnp.bfloat16),
        grid_spec=pltpu.PrefetchScalarGridSpec(
            num_scalar_prefetch=0,
            grid=grid,
            in_specs=in_specs,
            out_specs=out_spec,
        ),
        compiler_params=pltpu.CompilerParams(
            dimension_semantics=("parallel",)),
        cost_estimate=pl.CostEstimate(flops=flops, transcendentals=0,
                                      bytes_accessed=bytes_accessed),
    )(x_pad, *weight_args)

    # Fused under this jit: discard padded rows/cols, upcast logits to f32.
    return out[:B, :num_classes].astype(jnp.float32)


# ------------------------- parameter handling ------------------------------ #
def init_raw_params(key, input_size, num_classes):
    """PyTorch-style init: Linear uniform +-1/sqrt(fan_in); fresh BatchNorm1d
    running stats (mean=0, var=1, gamma=1, beta=0)."""
    dims = [(input_size, 64), (64, 128), (128, 64), (64, num_classes)]
    raw = {}
    for idx, (fan_in, fan_out) in enumerate(dims, start=1):
        key, kw, kb = jax.random.split(key, 3)
        bound = 1.0 / jnp.sqrt(float(fan_in))
        raw[f"w{idx}"] = jax.random.uniform(
            kw, (fan_in, fan_out), jnp.float32, -bound, bound)
        raw[f"b{idx}"] = jax.random.uniform(
            kb, (1, fan_out), jnp.float32, -bound, bound)
    for idx, dim in zip((1, 2, 3), (64, 128, 64)):
        raw[f"gamma{idx}"] = jnp.ones((1, dim), jnp.float32)
        raw[f"beta{idx}"] = jnp.zeros((1, dim), jnp.float32)
        raw[f"mean{idx}"] = jnp.zeros((1, dim), jnp.float32)
        raw[f"var{idx}"] = jnp.ones((1, dim), jnp.float32)
    return raw


def fold_and_pad_params(raw, *, eps=1e-5, compute_dtype=jnp.bfloat16,
                        lane_pad=128):
    """Fold eval-mode BN into weights/biases; pad the output layer to a
    lane-dense (multiple of 128) column count; cast weights to compute dtype.
    Biases stay f32 (added after the f32 MXU accumulation)."""
    p = {}
    for i in (1, 2, 3):
        s = raw[f"gamma{i}"] / jnp.sqrt(raw[f"var{i}"] + eps)
        t = raw[f"beta{i}"] - raw[f"mean{i}"] * s
        p[f"w{i}"] = (raw[f"w{i}"] * s).astype(compute_dtype)
        p[f"b{i}"] = (raw[f"b{i}"] * s + t).astype(jnp.float32)
    nc = raw["w4"].shape[1]
    npad = max(lane_pad, _round_up(nc, lane_pad))
    p["w4"] = jnp.pad(raw["w4"], ((0, 0), (0, npad - nc))).astype(compute_dtype)
    p["b4"] = jnp.pad(raw["b4"], ((0, 0), (0, npad - nc))).astype(jnp.float32)
    return p


# ----------------------------- references ---------------------------------- #
def kernel_math_ref(x, p):
    """Pure-JAX replica of the exact math the kernel does (same bf16 casts,
    same bf16 final store)."""
    cd = p["w1"].dtype
    h = x.astype(cd)
    h = jnp.maximum(jnp.dot(h, p["w1"], preferred_element_type=jnp.float32)
                    + p["b1"], 0.0).astype(cd)
    h = jnp.maximum(jnp.dot(h, p["w2"], preferred_element_type=jnp.float32)
                    + p["b2"], 0.0).astype(cd)
    h = jnp.maximum(jnp.dot(h, p["w3"], preferred_element_type=jnp.float32)
                    + p["b3"], 0.0).astype(cd)
    out = (jnp.dot(h, p["w4"], preferred_element_type=jnp.float32) + p["b4"])
    return out.astype(jnp.bfloat16).astype(jnp.float32)


def torch_eval_ref(x, raw, eps=1e-5):
    """f32 reference matching the PyTorch module in eval() mode."""
    h = x
    for i in (1, 2, 3):
        h = h @ raw[f"w{i}"] + raw[f"b{i}"]
        h = ((h - raw[f"mean{i}"]) / jnp.sqrt(raw[f"var{i}"] + eps)
             * raw[f"gamma{i}"] + raw[f"beta{i}"])
        h = jnp.maximum(h, 0.0)          # Dropout(p=0.5) is identity in eval
    return h @ raw["w4"] + raw["b4"]


# ------------------------------- main --------------------------------------- #
if __name__ == "__main__":
    input_size = 32
    num_classes = 4
    batch = 200          # deliberately not a tile multiple -> exercises padding

    key = jax.random.PRNGKey(0)
    key, kx = jax.random.split(key)
    x = jax.random.normal(kx, (batch, input_size), jnp.float32)

    raw = init_raw_params(key, input_size, num_classes)
    p = fold_and_pad_params(raw, compute_dtype=jnp.bfloat16)

    out = mlp_forward(x, p["w1"], p["b1"], p["w2"], p["b2"],
                      p["w3"], p["b3"], p["w4"], p["b4"],
                      num_classes=num_classes)
    out = jax.block_until_ready(out)
    assert out.shape == (batch, num_classes)

    # 1) Exact-math check: kernel matches the same bf16-cast computation
    #    (loose enough to tolerate MXU vs XLA accumulation-order + bf16 ulp).
    ref_exact = kernel_math_ref(x, p)[:, :num_classes]
    assert jnp.allclose(out, ref_exact, atol=2e-2, rtol=2e-2)

    # 2) Module-semantics check: matches PyTorch eval-mode f32 math within
    #    bf16 input/weight/output precision.
    ref_f32 = torch_eval_ref(x, raw)
    assert jnp.allclose(out, ref_f32, atol=5e-2, rtol=5e-2)

    # TODO(synk): training-mode BatchNorm (batch statistics) and active Dropout
    # are not implemented; this kernel covers eval/inference semantics only.
    print("KERNEL_OK")
</pallas_src>

<mosaic_0001>
module attributes {stable_mosaic.version = 11 : i64} {
  func.func @mlp_kernel(%arg0: i32, %arg1: memref<208x32xf32, #tpu.memory_space<vmem>>, %arg2: memref<32x64xbf16, #tpu.memory_space<vmem>>, %arg3: memref<1x64xf32, #tpu.memory_space<vmem>>, %arg4: memref<64x128xbf16, #tpu.memory_space<vmem>>, %arg5: memref<1x128xf32, #tpu.memory_space<vmem>>, %arg6: memref<128x64xbf16, #tpu.memory_space<vmem>>, %arg7: memref<1x64xf32, #tpu.memory_space<vmem>>, %arg8: memref<64x128xbf16, #tpu.memory_space<vmem>>, %arg9: memref<1x128xf32, #tpu.memory_space<vmem>>, %arg10: memref<208x128xbf16, #tpu.memory_space<vmem>>) attributes {dimension_semantics = [#tpu.dimension_semantics<parallel>], iteration_bounds = array<i64: 1>, scalar_prefetch = 0 : i64, scratch_operands = 0 : i64, tpu.core_type = #tpu.core_type<tc>, window_params = [{transform_indices = @transform_0, window_bounds = array<i64: 208, 32>}, {pipeline_mode = #tpu.pipeline_mode<synchronous>, transform_indices = @transform_1, window_bounds = array<i64: 32, 64>}, {pipeline_mode = #tpu.pipeline_mode<synchronous>, transform_indices = @transform_2, window_bounds = array<i64: 1, 64>}, {pipeline_mode = #tpu.pipeline_mode<synchronous>, transform_indices = @transform_3, window_bounds = array<i64: 64, 128>}, {pipeline_mode = #tpu.pipeline_mode<synchronous>, transform_indices = @transform_4, window_bounds = array<i64: 1, 128>}, {pipeline_mode = #tpu.pipeline_mode<synchronous>, transform_indices = @transform_5, window_bounds = array<i64: 128, 64>}, {pipeline_mode = #tpu.pipeline_mode<synchronous>, transform_indices = @transform_6, window_bounds = array<i64: 1, 64>}, {pipeline_mode = #tpu.pipeline_mode<synchronous>, transform_indices = @transform_7, window_bounds = array<i64: 64, 128>}, {pipeline_mode = #tpu.pipeline_mode<synchronous>, transform_indices = @transform_8, window_bounds = array<i64: 1, 128>}, {transform_indices = @transform_9, window_bounds = array<i64: 208, 128>}]} {
    %c0 = arith.constant 0 : index
    %c0_0 = arith.constant 0 : index
    %0 = vector.load %arg1[%c0, %c0_0] : memref<208x32xf32, #tpu.memory_space<vmem>>, vector<208x32xf32>
    %1 = arith.truncf %0 : vector<208x32xf32> to vector<208x32xbf16>
    %c0_1 = arith.constant 0 : index
    %c0_2 = arith.constant 0 : index
    %2 = vector.load %arg2[%c0_1, %c0_2] : memref<32x64xbf16, #tpu.memory_space<vmem>>, vector<32x64xbf16>
    %cst = arith.constant dense<0.000000e+00> : vector<208x64xf32>
    %3 = tpu.matmul %1, %2, %cst {dimension_numbers = #tpu.dot_dimension_numbers<[1], [0], [0], [1], [0, 0, 1, 1], [], []>} : vector<208x32xbf16>, vector<32x64xbf16>, vector<208x64xf32> -> vector<208x64xf32>
    %c0_3 = arith.constant 0 : index
    %c0_4 = arith.constant 0 : index
    %4 = vector.load %arg3[%c0_3, %c0_4] : memref<1x64xf32, #tpu.memory_space<vmem>>, vector<1x64xf32>
    %5 = vector.broadcast %4 : vector<1x64xf32> to vector<208x64xf32>
    %6 = arith.addf %3, %5 : vector<208x64xf32>
    %cst_5 = arith.constant 0.000000e+00 : f32
    %7 = vector.broadcast %cst_5 : f32 to vector<208x64xf32>
    %8 = arith.maximumf %6, %7 : vector<208x64xf32>
    %9 = arith.truncf %8 : vector<208x64xf32> to vector<208x64xbf16>
    %c0_6 = arith.constant 0 : index
    %c0_7 = arith.constant 0 : index
    %10 = vector.load %arg4[%c0_6, %c0_7] : memref<64x128xbf16, #tpu.memory_space<vmem>>, vector<64x128xbf16>
    %cst_8 = arith.constant dense<0.000000e+00> : vector<208x128xf32>
    %11 = tpu.matmul %9, %10, %cst_8 {dimension_numbers = #tpu.dot_dimension_numbers<[1], [0], [0], [1], [0, 0, 1, 1], [], []>} : vector<208x64xbf16>, vector<64x128xbf16>, vector<208x128xf32> -> vector<208x128xf32>
    %c0_9 = arith.constant 0 : index
    %c0_10 = arith.constant 0 : index
    %12 = vector.load %arg5[%c0_9, %c0_10] : memref<1x128xf32, #tpu.memory_space<vmem>>, vector<1x128xf32>
    %13 = vector.broadcast %12 : vector<1x128xf32> to vector<208x128xf32>
    %14 = arith.addf %11, %13 : vector<208x128xf32>
    %cst_11 = arith.constant 0.000000e+00 : f32
    %15 = vector.broadcast %cst_11 : f32 to vector<208x128xf32>
    %16 = arith.maximumf %14, %15 : vector<208x128xf32>
    %17 = arith.truncf %16 : vector<208x128xf32> to vector<208x128xbf16>
    %c0_12 = arith.constant 0 : index
    %c0_13 = arith.constant 0 : index
    %18 = vector.load %arg6[%c0_12, %c0_13] : memref<128x64xbf16, #tpu.memory_space<vmem>>, vector<128x64xbf16>
    %cst_14 = arith.constant dense<0.000000e+00> : vector<208x64xf32>
    %19 = tpu.matmul %17, %18, %cst_14 {dimension_numbers = #tpu.dot_dimension_numbers<[1], [0], [0], [1], [0, 0, 1, 1], [], []>} : vector<208x128xbf16>, vector<128x64xbf16>, vector<208x64xf32> -> vector<208x64xf32>
    %c0_15 = arith.constant 0 : index
    %c0_16 = arith.constant 0 : index
    %20 = vector.load %arg7[%c0_15, %c0_16] : memref<1x64xf32, #tpu.memory_space<vmem>>, vector<1x64xf32>
    %21 = vector.broadcast %20 : vector<1x64xf32> to vector<208x64xf32>
    %22 = arith.addf %19, %21 : vector<208x64xf32>
    %cst_17 = arith.constant 0.000000e+00 : f32
    %23 = vector.broadcast %cst_17 : f32 to vector<208x64xf32>
    %24 = arith.maximumf %22, %23 : vector<208x64xf32>
    %25 = arith.truncf %24 : vector<208x64xf32> to vector<208x64xbf16>
    %c0_18 = arith.constant 0 : index
    %c0_19 = arith.constant 0 : index
    %26 = vector.load %arg8[%c0_18, %c0_19] : memref<64x128xbf16, #tpu.memory_space<vmem>>, vector<64x128xbf16>
    %cst_20 = arith.constant dense<0.000000e+00> : vector<208x128xf32>
    %27 = tpu.matmul %25, %26, %cst_20 {dimension_numbers = #tpu.dot_dimension_numbers<[1], [0], [0], [1], [0, 0, 1, 1], [], []>} : vector<208x64xbf16>, vector<64x128xbf16>, vector<208x128xf32> -> vector<208x128xf32>
    %c0_21 = arith.constant 0 : index
    %c0_22 = arith.constant 0 : index
    %28 = vector.load %arg9[%c0_21, %c0_22] : memref<1x128xf32, #tpu.memory_space<vmem>>, vector<1x128xf32>
    %29 = vector.broadcast %28 : vector<1x128xf32> to vector<208x128xf32>
    %30 = arith.addf %27, %29 : vector<208x128xf32>
    %31 = arith.truncf %30 : vector<208x128xf32> to vector<208x128xbf16>
    %c0_23 = arith.constant 0 : index
    %c0_24 = arith.constant 0 : index
    %32 = vector.load %arg10[%c0_23, %c0_24] : memref<208x128xbf16, #tpu.memory_space<vmem>>, vector<208x128xbf16>
    tpu.vector_store %arg10[%c0_23, %c0_24], %31 {strides = array<i32>} : memref<208x128xbf16, #tpu.memory_space<vmem>>, vector<208x128xbf16>,
    return
  }
  func.func @transform_0(%arg0: i32) -> (i32, i32) {
    %c0_i32 = arith.constant 0 : i32
    %c0_i32_0 = arith.constant 0 : i32
    return %arg0, %c0_i32 : i32, i32
  }
  func.func @transform_1(%arg0: i32) -> (i32, i32) {
    %c0_i32 = arith.constant 0 : i32
    %c0_i32_0 = arith.constant 0 : i32
    %c0_i32_1 = arith.constant 0 : i32
    return %c0_i32, %c0_i32_0 : i32, i32
  }
  func.func @transform_2(%arg0: i32) -> (i32, i32) {
    %c0_i32 = arith.constant 0 : i32
    %c0_i32_0 = arith.constant 0 : i32
    %c0_i32_1 = arith.constant 0 : i32
    return %c0_i32, %c0_i32_0 : i32, i32
  }
  func.func @transform_3(%arg0: i32) -> (i32, i32) {
    %c0_i32 = arith.constant 0 : i32
    %c0_i32_0 = arith.constant 0 : i32
    %c0_i32_1 = arith.constant 0 : i32
    return %c0_i32, %c0_i32_0 : i32, i32
  }
  func.func @transform_4(%arg0: i32) -> (i32, i32) {
    %c0_i32 = arith.constant 0 : i32
    %c0_i32_0 = arith.constant 0 : i32
    %c0_i32_1 = arith.constant 0 : i32
    return %c0_i32, %c0_i32_0 : i32, i32
  }
  func.func @transform_5(%arg0: i32) -> (i32, i32) {
    %c0_i32 = arith.constant 0 : i32
    %c0_i32_0 = arith.constant 0 : i32
    %c0_i32_1 = arith.constant 0 : i32
    return %c0_i32, %c0_i32_0 : i32, i32
  }
  func.func @transform_6(%arg0: i32) -> (i32, i32) {
    %c0_i32 = arith.constant 0 : i32
    %c0_i32_0 = arith.constant 0 : i32
    %c0_i32_1 = arith.constant 0 : i32
    return %c0_i32, %c0_i32_0 : i32, i32
  }
  func.func @transform_7(%arg0: i32) -> (i32, i32) {
    %c0_i32 = arith.constant 0 : i32
    %c0_i32_0 = arith.constant 0 : i32
    %c0_i32_1 = arith.constant 0 : i32
    return %c0_i32, %c0_i32_0 : i32, i32
  }
  func.func @transform_8(%arg0: i32) -> (i32, i32) {
    %c0_i32 = arith.constant 0 : i32
    %c0_i32_0 = arith.constant 0 : i32
    %c0_i32_1 = arith.constant 0 : i32
    return %c0_i32, %c0_i32_0 : i32, i32
  }
  func.func @transform_9(%arg0: i32) -> (i32, i32) {
    %c0_i32 = arith.constant 0 : i32
    %c0_i32_0 = arith.constant 0 : i32
    return %arg0, %c0_i32 : i32, i32
  }
}

</mosaic_0001>

<llo_original>
// kernel: mlp_forward.1
$region0: #{mlp_forward.1}
  #allocation0 [shape = 'u32[]', space=smem, size = 0x4, offset = 0x4, fixed_abs, tag = 'smem constant byte address 0x4 - core index']
  #allocation1 [shape = 'u32[144,128]{1,0:T(1,128)}', space=vmem, size = 0x12000, scoped, tag = 'internal scratch']
  %s0 = inlined_call_operand.vmem [shape: f32[208,32], index: 0, kind: input, shape index: {}]
  %s1 = inlined_call_operand.vmem [shape: bf16[32,64], index: 1, kind: input, shape index: {}]
  %s2 = inlined_call_operand.vmem [shape: f32[1,64], index: 2, kind: input, shape index: {}]
  %s3 = inlined_call_operand.vmem [shape: bf16[64,128], index: 3, kind: input, shape index: {}]
  %s4 = inlined_call_operand.vmem [shape: f32[1,128], index: 4, kind: input, shape index: {}]
  %s5 = inlined_call_operand.vmem [shape: bf16[128,64], index: 5, kind: input, shape index: {}]
  %s6 = inlined_call_operand.vmem [shape: f32[1,64], index: 6, kind: input, shape index: {}]
  %s7 = inlined_call_operand.vmem [shape: bf16[64,128], index: 7, kind: input, shape index: {}]
  %s8 = inlined_call_operand.vmem [shape: f32[1,128], index: 8, kind: input, shape index: {}]
  %s9 = inlined_call_operand.vmem [shape: bf16[208,128], index: 9, kind: output, shape index: {}]
  %s10 = sld [smem:[#allocation0]]
  $region46: #{mlp_forward.1} parent=0
    _
  %s12 = ssub.s32 1, %s10
  %s13 = scalar_select 0, %s12, %s10
  // Predicated region
  $region2: #{mlp_forward.1} parent=0 // pred_check
    _
  $region3: #{mlp_forward.1} parent=0 // pred_check_branch
    %15 = sbr.rel (0) target = $region5
  $region4: #{mlp_forward.1} parent=0 // pred_region
    _
  $region5: #{mlp_forward.1} parent=0 // pred_fallthru
    _
  // Predicated region
  $region6: #{mlp_forward.1} parent=0 // pred_check
    _
  $region7: #{mlp_forward.1} parent=0 // pred_check_branch
    %17 = sbr.rel (0) target = $region9
  $region8: #{mlp_forward.1} parent=0 // pred_region
    _
  $region9: #{mlp_forward.1} parent=0 // pred_fallthru
    _
  // Predicated region
  $region10: #{mlp_forward.1} parent=0 // pred_check
    _
  $region11: #{mlp_forward.1} parent=0 // pred_check_branch
    %19 = sbr.rel (0) target = $region13
  $region12: #{mlp_forward.1} parent=0 // pred_region
    _
  $region13: #{mlp_forward.1} parent=0 // pred_fallthru
    _
  // Predicated region
  $region14: #{mlp_forward.1} parent=0 // pred_check
    _
  $region15: #{mlp_forward.1} parent=0 // pred_check_branch
    %21 = sbr.rel (0) target = $region17
  $region16: #{mlp_forward.1} parent=0 // pred_region
    _
  $region17: #{mlp_forward.1} parent=0 // pred_fallthru
    _
  // Predicated region
  $region18: #{mlp_forward.1} parent=0 // pred_check
    _
  $region19: #{mlp_forward.1} parent=0 // pred_check_branch
    %23 = sbr.rel (0) target = $region21
  $region20: #{mlp_forward.1} parent=0 // pred_region
    _
  $region21: #{mlp_forward.1} parent=0 // pred_fallthru
    _
  // Predicated region
  $region22: #{mlp_forward.1} parent=0 // pred_check
    _
  $region23: #{mlp_forward.1} parent=0 // pred_check_branch
    %25 = sbr.rel (0) target = $region25
  $region24: #{mlp_forward.1} parent=0 // pred_region
    _
  $region25: #{mlp_forward.1} parent=0 // pred_fallthru
    _
  // Predicated region
  $region26: #{mlp_forward.1} parent=0 // pred_check
    _
  $region27: #{mlp_forward.1} parent=0 // pred_check_branch
    %27 = sbr.rel (0) target = $region29
  $region28: #{mlp_forward.1} parent=0 // pred_region
    _
  $region29: #{mlp_forward.1} parent=0 // pred_fallthru
    _
  // Predicated region
  $region30: #{mlp_forward.1} parent=0 // pred_check
    _
  $region31: #{mlp_forward.1} parent=0 // pred_check_branch
    %29 = sbr.rel (0) target = $region33
  $region32: #{mlp_forward.1} parent=0 // pred_region
    _
  $region33: #{mlp_forward.1} parent=0 // pred_fallthru
    _
  // Predicated region
  $region34: #{mlp_forward.1} parent=0 // pred_check
    _
  $region35: #{mlp_forward.1} parent=0 // pred_check_branch
    %31 = sbr.rel (0) target = $region37
  $region36: #{mlp_forward.1} parent=0 // pred_region
    _
  $region37: #{mlp_forward.1} parent=0 // pred_fallthru
    _
  %v33 = vld [vmem:[%s0] sm:$0xff]
  %v34 = vld [vmem:[%s0 + $0x8] sm:$0xff]
  %v35 = vld [vmem:[%s0 + $0x10] sm:$0xff]
  %v36 = vld [vmem:[%s0 + $0x18] sm:$0xff]
  %v37 = vld [vmem:[%s0 + $0x20] sm:$0xff]
  %v38 = vld [vmem:[%s0 + $0x28] sm:$0xff]
  %v39 = vld [vmem:[%s0 + $0x30] sm:$0xff]
  %v40 = vld [vmem:[%s0 + $0x38] sm:$0xff]
  %v41 = vld [vmem:[%s0 + $0x40] sm:$0xff]
  %v42 = vld [vmem:[%s0 + $0x48] sm:$0xff]
  %v43 = vld [vmem:[%s0 + $0x50] sm:$0xff]
  %v44 = vld [vmem:[%s0 + $0x58] sm:$0xff]
  %v45 = vld [vmem:[%s0 + $0x60] sm:$0xff]
  %v46 = vld [vmem:[%s0 + $0x68] sm:$0xff]
  %v47 = vld [vmem:[%s0 + $0x70] sm:$0xff]
  %v48 = vld [vmem:[%s0 + $0x78] sm:$0xff]
  %v49 = vld [vmem:[%s0 + $0x80] sm:$0xff]
  %v50 = vld [vmem:[%s0 + $0x88] sm:$0xff]
  %v51 = vld [vmem:[%s0 + $0x90] sm:$0xff]
  %v52 = vld [vmem:[%s0 + $0x98] sm:$0xff]
  %v53 = vld [vmem:[%s0 + $0xa0] sm:$0xff]
  %v54 = vld [vmem:[%s0 + $0xa8] sm:$0xff]
  %v55 = vld [vmem:[%s0 + $0xb0] sm:$0xff]
  %v56 = vld [vmem:[%s0 + $0xb8] sm:$0xff]
  %v57 = vld [vmem:[%s0 + $0xc0] sm:$0xff]
  %v58 = vld [vmem:[%s0 + $0xc8] sm:$0xff]
  %v59 = vpack.c.bf16 %v34, %v33
  %v60 = vpack.c.bf16 %v36, %v35
  %v61 = vpack.c.bf16 %v38, %v37
  %v62 = vpack.c.bf16 %v40, %v39
  %v63 = vpack.c.bf16 %v42, %v41
  %v64 = vpack.c.bf16 %v44, %v43
  %v65 = vpack.c.bf16 %v46, %v45
  %v66 = vpack.c.bf16 %v48, %v47
  %v67 = vpack.c.bf16 %v50, %v49
  %v68 = vpack.c.bf16 %v52, %v51
  %v69 = vpack.c.bf16 %v54, %v53
  %v70 = vpack.c.bf16 %v56, %v55
  %v71 = vpack.c.bf16 %v58, %v57
  %v72 = vld [vmem:[%s1] sm:$0xf]
  %v73 = vld [vmem:[%s1 + $0x4] sm:$0xf]
  %v74 = vld [vmem:[%s1 + $0x8] sm:$0xf]
  %v75 = vld [vmem:[%s1 + $0xc] sm:$0xf]
  %v76 = vld [vmem:[%s2] sm:$0x1]
  %v78 = vlaneseq
  %v79 = vshrl.u32 %v78, 7
  %v80 = vsub.s32 0, %v79
  %v81 = vrot.slane %v76, %v80
  %v87 = vunpack.c.l.b16 %v72
  %v88 = vunpack.c.l.b16 %v73
  %v89 = vunpack.c.l.b16 %v74
  %v90 = vunpack.c.l.b16 %v75
  %v91 = vpack.c.b16 %v88, %v87
  %v92 = vpack.c.b16 %v90, %v89
  %vm95 = vcmask 261120
  %v97 = vsel %vm95, %v59, 0
  %v100 = vsel %vm95, %v60, 0
  %v103 = vsel %vm95, %v61, 0
  %v106 = vsel %vm95, %v62, 0
  %v109 = vsel %vm95, %v63, 0
  %v112 = vsel %vm95, %v64, 0
  %v115 = vsel %vm95, %v65, 0
  %v118 = vsel %vm95, %v66, 0
  %v121 = vsel %vm95, %v67, 0
  %v124 = vsel %vm95, %v68, 0
  %v127 = vsel %vm95, %v69, 0
  %v130 = vsel %vm95, %v70, 0
  %v133 = vsel %vm95, %v71, 0
  %135 = vmatprep.subr.bf16.mxu0 0
  %136 = vmatpush1.bf16.msra.mxu0 %v91
  %137 = vmatprep.subr.bf16.mxu0 0
  %138 = vmatpush1.bf16.msra.mxu0 %v92
  %139 = vmatprep.subr.bf16.mxu0 0
  %140 = vmatpush1.bf16.msra.mxu0 0
  %141 = vmatprep.subr.bf16.mxu0 0
  %142 = vmatpush1.bf16.msra.mxu0 0
  %143 = vmatprep.subr.bf16.mxu0 0
  %144 = vmatpush1.bf16.msra.mxu0 0
  %145 = vmatprep.subr.bf16.mxu0 0
  %146 = vmatpush1.bf16.msra.mxu0 0
  %147 = vmatprep.subr.bf16.mxu0 0
  %148 = vmatpush1.bf16.msra.mxu0 0
  %149 = vmatprep.subr.bf16.mxu0 0
  %150 = vmatpush1.bf16.msra.mxu0 0
  %151 = vmatprep.subr.bf16.mxu0 0
  %152 = vmatpush1.bf16.msra.mxu0 0
  %153 = vmatprep.subr.bf16.mxu0 0
  %154 = vmatpush1.bf16.msra.mxu0 0
  %155 = vmatprep.subr.bf16.mxu0 0
  %156 = vmatpush1.bf16.msra.mxu0 0
  %157 = vmatprep.subr.bf16.mxu0 0
  %158 = vmatpush1.bf16.msra.mxu0 0
  %159 = vmatprep.subr.bf16.mxu0 0
  %160 = vmatpush1.bf16.msra.mxu0 0
  %161 = vmatprep.subr.bf16.mxu0 0
  %162 = vmatpush1.bf16.msra.mxu0 0
  %163 = vmatprep.subr.bf16.mxu0 0
  %164 = vmatpush1.bf16.msra.mxu0 0
  %165 = vmatprep.subr.bf16.mxu0 0
  %166 = vmatpush1.bf16.msra.mxu0 0
  %167 = vmatprep.mubr.bf16.mxu0 0
  %168 = vmatmul.mubr.bf16.gmra.mrb[0].mxu0 %v97
  %v169 = vpop.f32.mrb[0].mxu0
  %v170 = vadd.f32 %v81, %v169
  %v171 = vpop.f32.mrb[0].mxu0
  %v172 = vpop.f32.mrb[0].mxu0
  %v173 = vadd.f32 %v81, %v172
  %v174 = vpop.f32.mrb[0].mxu0
  %175 = vmatprep.mubr.bf16.mxu0 0
  %176 = vmatmul.mubr.bf16.gmra.mrb[0].mxu0 %v100
  %v177 = vpop.f32.mrb[0].mxu0
  %v178 = vadd.f32 %v81, %v177
  %v179 = vpop.f32.mrb[0].mxu0
  %v180 = vpop.f32.mrb[0].mxu0
  %v181 = vadd.f32 %v81, %v180
  %v182 = vpop.f32.mrb[0].mxu0
  %183 = vmatprep.mubr.bf16.mxu0 0
  %184 = vmatmul.mubr.bf16.gmra.mrb[0].mxu0 %v103
  %v185 = vpop.f32.mrb[0].mxu0
  %v186 = vadd.f32 %v81, %v185
  %v187 = vpop.f32.mrb[0].mxu0
  %v188 = vpop.f32.mrb[0].mxu0
  %v189 = vadd.f32 %v81, %v188
  %v190 = vpop.f32.mrb[0].mxu0
  %191 = vmatprep.mubr.bf16.mxu0 0
  %192 = vmatmul.mubr.bf16.gmra.mrb[0].mxu0 %v106
  %v193 = vpop.f32.mrb[0].mxu0
  %v194 = vadd.f32 %v81, %v193
  %v195 = vpop.f32.mrb[0].mxu0
  %v196 = vpop.f32.mrb[0].mxu0
  %v197 = vadd.f32 %v81, %v196
  %v198 = vpop.f32.mrb[0].mxu0
  %199 = vmatprep.mubr.bf16.mxu0 0
  %200 = vmatmul.mubr.bf16.gmra.mrb[0].mxu0 %v109
  %v201 = vpop.f32.mrb[0].mxu0
  %v202 = vadd.f32 %v81, %v201
  %v203 = vpop.f32.mrb[0].mxu0
  %v204 = vpop.f32.mrb[0].mxu0
  %v205 = vadd.f32 %v81, %v204
  %v206 = vpop.f32.mrb[0].mxu0
  %207 = vmatprep.mubr.bf16.mxu0 0
  %208 = vmatmul.mubr.bf16.gmra.mrb[0].mxu0 %v112
  %v209 = vpop.f32.mrb[0].mxu0
  %v210 = vadd.f32 %v81, %v209
  %v211 = vpop.f32.mrb[0].mxu0
  %v212 = vpop.f32.mrb[0].mxu0
  %v213 = vadd.f32 %v81, %v212
  %v214 = vpop.f32.mrb[0].mxu0
  %215 = vmatprep.mubr.bf16.mxu0 0
  %216 = vmatmul.mubr.bf16.gmra.mrb[0].mxu0 %v115
  %v217 = vpop.f32.mrb[0].mxu0
  %v218 = vadd.f32 %v81, %v217
  %v219 = vpop.f32.mrb[0].mxu0
  %v220 = vpop.f32.mrb[0].mxu0
  %v221 = vadd.f32 %v81, %v220
  %v222 = vpop.f32.mrb[0].mxu0
  %223 = vmatprep.mubr.bf16.mxu0 0
  %224 = vmatmul.mubr.bf16.gmra.mrb[0].mxu0 %v118
  %v225 = vpop.f32.mrb[0].mxu0
  %v226 = vadd.f32 %v81, %v225
  %v227 = vpop.f32.mrb[0].mxu0
  %v228 = vpop.f32.mrb[0].mxu0
  %v229 = vadd.f32 %v81, %v228
  %v230 = vpop.f32.mrb[0].mxu0
  %231 = vmatprep.mubr.bf16.mxu0 0
  %232 = vmatmul.mubr.bf16.gmra.mrb[0].mxu0 %v121
  %v233 = vpop.f32.mrb[0].mxu0
  %v234 = vadd.f32 %v81, %v233
  %v235 = vpop.f32.mrb[0].mxu0
  %v236 = vpop.f32.mrb[0].mxu0
  %v237 = vadd.f32 %v81, %v236
  %v238 = vpop.f32.mrb[0].mxu0
  %239 = vmatprep.mubr.bf16.mxu0 0
  %240 = vmatmul.mubr.bf16.gmra.mrb[0].mxu0 %v124
  %v241 = vpop.f32.mrb[0].mxu0
  %v242 = vadd.f32 %v81, %v241
  %v243 = vpop.f32.mrb[0].mxu0
  %v244 = vpop.f32.mrb[0].mxu0
  %v245 = vadd.f32 %v81, %v244
  %v246 = vpop.f32.mrb[0].mxu0
  %247 = vmatprep.mubr.bf16.mxu0 0
  %248 = vmatmul.mubr.bf16.gmra.mrb[0].mxu0 %v127
  %v249 = vpop.f32.mrb[0].mxu0
  %v250 = vadd.f32 %v81, %v249
  %v251 = vpop.f32.mrb[0].mxu0
  %v252 = vpop.f32.mrb[0].mxu0
  %v253 = vadd.f32 %v81, %v252
  %v254 = vpop.f32.mrb[0].mxu0
  %255 = vmatprep.mubr.bf16.mxu0 0
  %256 = vmatmul.mubr.bf16.gmra.mrb[0].mxu0 %v130
  %v257 = vpop.f32.mrb[0].mxu0
  %v258 = vadd.f32 %v81, %v257
  %v259 = vpop.f32.mrb[0].mxu0
  %v260 = vpop.f32.mrb[0].mxu0
  %v261 = vadd.f32 %v81, %v260
  %v262 = vpop.f32.mrb[0].mxu0
  %263 = vmatprep.mubr.bf16.mxu0 0
  %264 = vmatmul.mubr.bf16.gmra.mrb[0].mxu0 %v133
  %v265 = vpop.f32.mrb[0].mxu0
  %v266 = vadd.f32 %v81, %v265
  %v267 = vpop.f32.mrb[0].mxu0
  %v268 = vpop.f32.mrb[0].mxu0
  %v269 = vadd.f32 %v81, %v268
  %v270 = vpop.f32.mrb[0].mxu0
  %271 = vdwg.mxu0
  %v272 = vmax.f32 %v170, 0.0
  %v273 = vmax.f32 %v173, 0.0
  %v274 = vmax.f32 %v178, 0.0
  %v275 = vmax.f32 %v181, 0.0
  %v276 = vmax.f32 %v186, 0.0
  %v277 = vmax.f32 %v189, 0.0
  %v278 = vmax.f32 %v194, 0.0
  %v279 = vmax.f32 %v197, 0.0
  %v280 = vmax.f32 %v202, 0.0
  %v281 = vmax.f32 %v205, 0.0
  %v282 = vmax.f32 %v210, 0.0
  %v283 = vmax.f32 %v213, 0.0
  %v284 = vmax.f32 %v218, 0.0
  %v285 = vmax.f32 %v221, 0.0
  %v286 = vmax.f32 %v226, 0.0
  %v287 = vmax.f32 %v229, 0.0
  %v288 = vmax.f32 %v234, 0.0
  %v289 = vmax.f32 %v237, 0.0
  %v290 = vmax.f32 %v242, 0.0
  %v291 = vmax.f32 %v245, 0.0
  %v292 = vmax.f32 %v250, 0.0
  %v293 = vmax.f32 %v253, 0.0
  %v294 = vmax.f32 %v258, 0.0
  %v295 = vmax.f32 %v261, 0.0
  %v296 = vmax.f32 %v266, 0.0
  %v297 = vmax.f32 %v269, 0.0
  %v298 = vpack.c.bf16 %v273, %v272
  %v299 = vpack.c.bf16 %v275, %v274
  %v300 = vpack.c.bf16 %v277, %v276
  %v301 = vpack.c.bf16 %v279, %v278
  %v302 = vpack.c.bf16 %v281, %v280
  %v303 = vpack.c.bf16 %v283, %v282
  %v304 = vpack.c.bf16 %v285, %v284
  %v305 = vpack.c.bf16 %v287, %v286
  %v306 = vpack.c.bf16 %v289, %v288
  %v307 = vpack.c.bf16 %v291, %v290
  %v308 = vpack.c.bf16 %v293, %v292
  %v309 = vpack.c.bf16 %v295, %v294
  %v310 = vpack.c.bf16 %v297, %v296
  %v311 = vld [vmem:[%s3] sm:$0xf]
  %v312 = vld [vmem:[%s3 + $0x4] sm:$0xf]
  %v313 = vld [vmem:[%s3 + $0x8] sm:$0xf]
  %v314 = vld [vmem:[%s3 + $0xc] sm:$0xf]
  %v315 = vld [vmem:[%s3 + $0x10] sm:$0xf]
  %v316 = vld [vmem:[%s3 + $0x14] sm:$0xf]
  %v317 = vld [vmem:[%s3 + $0x18] sm:$0xf]
  %v318 = vld [vmem:[%s3 + $0x1c] sm:$0xf]
  %v319 = vld [vmem:[%s4] sm:$0x1]
  %v321 = vlaneseq
  %v322 = vshrl.u32 %v321, 7
  %v323 = vsub.s32 0, %v322
  %v324 = vrot.slane %v319, %v323
  %v334 = vunpack.c.l.b16 %v311
  %v335 = vunpack.c.l.b16 %v312
  %v336 = vunpack.c.l.b16 %v313
  %v337 = vunpack.c.l.b16 %v314
  %v338 = vunpack.c.l.b16 %v315
  %v339 = vunpack.c.l.b16 %v316
  %v340 = vunpack.c.l.b16 %v317
  %v341 = vunpack.c.l.b16 %v318
  %v342 = vpack.c.b16 %v335, %v334
  %v343 = vpack.c.b16 %v337, %v336
  %v344 = vpack.c.b16 %v339, %v338
  %v345 = vpack.c.b16 %v341, %v340
  %vm350 = vcmask 523264
  %v352 = vsel %vm350, %v298, 0
  %v355 = vsel %vm350, %v299, 0
  %v358 = vsel %vm350, %v300, 0
  %v361 = vsel %vm350, %v301, 0
  %v364 = vsel %vm350, %v302, 0
  %v367 = vsel %vm350, %v303, 0
  %v370 = vsel %vm350, %v304, 0
  %v373 = vsel %vm350, %v305, 0
  %v376 = vsel %vm350, %v306, 0
  %v379 = vsel %vm350, %v307, 0
  %v382 = vsel %vm350, %v308, 0
  %v385 = vsel %vm350, %v309, 0
  %v388 = vsel %vm350, %v310, 0
  %390 = vmatprep.subr.bf16.mxu0 0
  %391 = vmatpush1.bf16.msra.mxu0 %v342
  %392 = vmatprep.subr.bf16.mxu0 0
  %393 = vmatpush1.bf16.msra.mxu0 %v343
  %394 = vmatprep.subr.bf16.mxu0 0
  %395 = vmatpush1.bf16.msra.mxu0 %v344
  %396 = vmatprep.subr.bf16.mxu0 0
  %397 = vmatpush1.bf16.msra.mxu0 %v345
  %398 = vmatprep.subr.bf16.mxu0 0
  %399 = vmatpush1.bf16.msra.mxu0 0
  %400 = vmatprep.subr.bf16.mxu0 0
  %401 = vmatpush1.bf16.msra.mxu0 0
  %402 = vmatprep.subr.bf16.mxu0 0
  %403 = vmatpush1.bf16.msra.mxu0 0
  %404 = vmatprep.subr.bf16.mxu0 0
  %405 = vmatpush1.bf16.msra.mxu0 0
  %406 = vmatprep.subr.bf16.mxu0 0
  %407 = vmatpush1.bf16.msra.mxu0 0
  %408 = vmatprep.subr.bf16.mxu0 0
  %409 = vmatpush1.bf16.msra.mxu0 0
  %410 = vmatprep.subr.bf16.mxu0 0
  %411 = vmatpush1.bf16.msra.mxu0 0
  %412 = vmatprep.subr.bf16.mxu0 0
  %413 = vmatpush1.bf16.msra.mxu0 0
  %414 = vmatprep.subr.bf16.mxu0 0
  %415 = vmatpush1.bf16.msra.mxu0 0
  %416 = vmatprep.subr.bf16.mxu0 0
  %417 = vmatpush1.bf16.msra.mxu0 0
  %418 = vmatprep.subr.bf16.mxu0 0
  %419 = vmatpush1.bf16.msra.mxu0 0
  %420 = vmatprep.subr.bf16.mxu0 0
  %421 = vmatpush1.bf16.msra.mxu0 0
  %422 = vmatprep.mubr.bf16.mxu0 0
  %423 = vmatmul.mubr.bf16.gmra.mrb[0].mxu0 %v352
  %v424 = vpop.f32.mrb[0].mxu0
  %v425 = vadd.f32 %v324, %v424
  %v426 = vpop.f32.mrb[0].mxu0
  %v427 = vpop.f32.mrb[0].mxu0
  %v428 = vadd.f32 %v324, %v427
  %v429 = vpop.f32.mrb[0].mxu0
  %430 = vmatprep.mubr.bf16.mxu0 0
  %431 = vmatmul.mubr.bf16.gmra.mrb[0].mxu0 %v355
  %v432 = vpop.f32.mrb[0].mxu0
  %v433 = vadd.f32 %v324, %v432
  %v434 = vpop.f32.mrb[0].mxu0
  %v435 = vpop.f32.mrb[0].mxu0
  %v436 = vadd.f32 %v324, %v435
  %v437 = vpop.f32.mrb[0].mxu0
  %438 = vmatprep.mubr.bf16.mxu0 0
  %439 = vmatmul.mubr.bf16.gmra.mrb[0].mxu0 %v358
  %v440 = vpop.f32.mrb[0].mxu0
  %v441 = vadd.f32 %v324, %v440
  %v442 = vpop.f32.mrb[0].mxu0
  %v443 = vpop.f32.mrb[0].mxu0
  %v444 = vadd.f32 %v324, %v443
  %v445 = vpop.f32.mrb[0].mxu0
  %446 = vmatprep.mubr.bf16.mxu0 0
  %447 = vmatmul.mubr.bf16.gmra.mrb[0].mxu0 %v361
  %v448 = vpop.f32.mrb[0].mxu0
  %v449 = vadd.f32 %v324, %v448
  %v450 = vpop.f32.mrb[0].mxu0
  %v451 = vpop.f32.mrb[0].mxu0
  %v452 = vadd.f32 %v324, %v451
  %v453 = vpop.f32.mrb[0].mxu0
  %454 = vmatprep.mubr.bf16.mxu0 0
  %455 = vmatmul.mubr.bf16.gmra.mrb[0].mxu0 %v364
  %v456 = vpop.f32.mrb[0].mxu0
  %v457 = vadd.f32 %v324, %v456
  %v458 = vpop.f32.mrb[0].mxu0
  %v459 = vpop.f32.mrb[0].mxu0
  %v460 = vadd.f32 %v324, %v459
  %v461 = vpop.f32.mrb[0].mxu0
  %462 = vmatprep.mubr.bf16.mxu0 0
  %463 = vmatmul.mubr.bf16.gmra.mrb[0].mxu0 %v367
  %v464 = vpop.f32.mrb[0].mxu0
  %v465 = vadd.f32 %v324, %v464
  %v466 = vpop.f32.mrb[0].mxu0
  %v467 = vpop.f32.mrb[0].mxu0
  %v468 = vadd.f32 %v324, %v467
  %v469 = vpop.f32.mrb[0].mxu0
  %470 = vmatprep.mubr.bf16.mxu0 0
  %471 = vmatmul.mubr.bf16.gmra.mrb[0].mxu0 %v370
  %v472 = vpop.f32.mrb[0].mxu0
  %v473 = vadd.f32 %v324, %v472
  %v474 = vpop.f32.mrb[0].mxu0
  %v475 = vpop.f32.mrb[0].mxu0
  %v476 = vadd.f32 %v324, %v475
  %v477 = vpop.f32.mrb[0].mxu0
  %478 = vmatprep.mubr.bf16.mxu0 0
  %479 = vmatmul.mubr.bf16.gmra.mrb[0].mxu0 %v373
  %v480 = vpop.f32.mrb[0].mxu0
  %v481 = vadd.f32 %v324, %v480
  %v482 = vpop.f32.mrb[0].mxu0
  %v483 = vpop.f32.mrb[0].mxu0
  %v484 = vadd.f32 %v324, %v483
  %v485 = vpop.f32.mrb[0].mxu0
  %486 = vmatprep.mubr.bf16.mxu0 0
  %487 = vmatmul.mubr.bf16.gmra.mrb[0].mxu0 %v376
  %v488 = vpop.f32.mrb[0].mxu0
  %v489 = vadd.f32 %v324, %v488
  %v490 = vpop.f32.mrb[0].mxu0
  %v491 = vpop.f32.mrb[0].mxu0
  %v492 = vadd.f32 %v324, %v491
  %v493 = vpop.f32.mrb[0].mxu0
  %494 = vmatprep.mubr.bf16.mxu0 0
  %495 = vmatmul.mubr.bf16.gmra.mrb[0].mxu0 %v379
  %v496 = vpop.f32.mrb[0].mxu0
  %v497 = vadd.f32 %v324, %v496
  %v498 = vpop.f32.mrb[0].mxu0
  %v499 = vpop.f32.mrb[0].mxu0
  %v500 = vadd.f32 %v324, %v499
  %v501 = vpop.f32.mrb[0].mxu0
  %502 = vmatprep.mubr.bf16.mxu0 0
  %503 = vmatmul.mubr.bf16.gmra.mrb[0].mxu0 %v382
  %v504 = vpop.f32.mrb[0].mxu0
  %v505 = vadd.f32 %v324, %v504
  %v506 = vpop.f32.mrb[0].mxu0
  %v507 = vpop.f32.mrb[0].mxu0
  %v508 = vadd.f32 %v324, %v507
  %v509 = vpop.f32.mrb[0].mxu0
  %510 = vmatprep.mubr.bf16.mxu0 0
  %511 = vmatmul.mubr.bf16.gmra.mrb[0].mxu0 %v385
  %v512 = vpop.f32.mrb[0].mxu0
  %v513 = vadd.f32 %v324, %v512
  %v514 = vpop.f32.mrb[0].mxu0
  %v515 = vpop.f32.mrb[0].mxu0
  %v516 = vadd.f32 %v324, %v515
  %v517 = vpop.f32.mrb[0].mxu0
  %518 = vmatprep.mubr.bf16.mxu0 0
  %519 = vmatmul.mubr.bf16.gmra.mrb[0].mxu0 %v388
  %v520 = vpop.f32.mrb[0].mxu0
  %v521 = vadd.f32 %v324, %v520
  %v522 = vpop.f32.mrb[0].mxu0
  %v523 = vpop.f32.mrb[0].mxu0
  %v524 = vadd.f32 %v324, %v523
  %v525 = vpop.f32.mrb[0].mxu0
  %526 = vdwg.mxu0
  %v527 = vmax.f32 %v425, 0.0
  %v528 = vmax.f32 %v428, 0.0
  %v529 = vmax.f32 %v433, 0.0
  %v530 = vmax.f32 %v436, 0.0
  %v531 = vmax.f32 %v441, 0.0
  %v532 = vmax.f32 %v444, 0.0
  %v533 = vmax.f32 %v449, 0.0
  %v534 = vmax.f32 %v452, 0.0
  %v535 = vmax.f32 %v457, 0.0
  %v536 = vmax.f32 %v460, 0.0
  %v537 = vmax.f32 %v465, 0.0
  %v538 = vmax.f32 %v468, 0.0
  %v539 = vmax.f32 %v473, 0.0
  %v540 = vmax.f32 %v476, 0.0
  %v541 = vmax.f32 %v481, 0.0
  %v542 = vmax.f32 %v484, 0.0
  %v543 = vmax.f32 %v489, 0.0
  %v544 = vmax.f32 %v492, 0.0
  %v545 = vmax.f32 %v497, 0.0
  %v546 = vmax.f32 %v500, 0.0
  %v547 = vmax.f32 %v505, 0.0
  %v548 = vmax.f32 %v508, 0.0
  %v549 = vmax.f32 %v513, 0.0
  %v550 = vmax.f32 %v516, 0.0
  %v551 = vmax.f32 %v521, 0.0
  %v552 = vmax.f32 %v524, 0.0
  %v553 = vpack.c.bf16 %v528, %v527
  %v554 = vpack.c.bf16 %v530, %v529
  %v555 = vpack.c.bf16 %v532, %v531
  %v556 = vpack.c.bf16 %v534, %v533
  %v557 = vpack.c.bf16 %v536, %v535
  %v558 = vpack.c.bf16 %v538, %v537
  %v559 = vpack.c.bf16 %v540, %v539
  %v560 = vpack.c.bf16 %v542, %v541
  %v561 = vpack.c.bf16 %v544, %v543
  %v562 = vpack.c.bf16 %v546, %v545
  %v563 = vpack.c.bf16 %v548, %v547
  %v564 = vpack.c.bf16 %v550, %v549
  %v565 = vpack.c.bf16 %v552, %v551
  %v566 = vld [vmem:[%s5] sm:$0xf]
  %v567 = vld [vmem:[%s5 + $0x4] sm:$0xf]
  %v568 = vld [vmem:[%s5 + $0x8] sm:$0xf]
  %v569 = vld [vmem:[%s5 + $0xc] sm:$0xf]
  %v570 = vld [vmem:[%s5 + $0x10] sm:$0xf]
  %v571 = vld [vmem:[%s5 + $0x14] sm:$0xf]
  %v572 = vld [vmem:[%s5 + $0x18] sm:$0xf]
  %v573 = vld [vmem:[%s5 + $0x1c] sm:$0xf]
  %v574 = vld [vmem:[%s5 + $0x20] sm:$0xf]
  %v575 = vld [vmem:[%s5 + $0x24] sm:$0xf]
  %v576 = vld [vmem:[%s5 + $0x28] sm:$0xf]
  %v577 = vld [vmem:[%s5 + $0x2c] sm:$0xf]
  %v578 = vld [vmem:[%s5 + $0x30] sm:$0xf]
  %v579 = vld [vmem:[%s5 + $0x34] sm:$0xf]
  %v580 = vld [vmem:[%s5 + $0x38] sm:$0xf]
  %v581 = vld [vmem:[%s5 + $0x3c] sm:$0xf]
  %v582 = vld [vmem:[%s6] sm:$0x1]
  %v584 = vlaneseq
  %v585 = vshrl.u32 %v584, 7
  %v586 = vsub.s32 0, %v585
  %v587 = vrot.slane %v582, %v586
  %v605 = vunpack.c.l.b16 %v566
  %v606 = vunpack.c.l.b16 %v567
  %v607 = vunpack.c.l.b16 %v568
  %v608 = vunpack.c.l.b16 %v569
  %v609 = vunpack.c.l.b16 %v570
  %v610 = vunpack.c.l.b16 %v571
  %v611 = vunpack.c.l.b16 %v572
  %v612 = vunpack.c.l.b16 %v573
  %v613 = vunpack.c.l.b16 %v574
  %v614 = vunpack.c.l.b16 %v575
  %v615 = vunpack.c.l.b16 %v576
  %v616 = vunpack.c.l.b16 %v577
  %v617 = vunpack.c.l.b16 %v578
  %v618 = vunpack.c.l.b16 %v579
  %v619 = vunpack.c.l.b16 %v580
  %v620 = vunpack.c.l.b16 %v581
  %v621 = vpack.c.b16 %v606, %v605
  %v622 = vpack.c.b16 %v608, %v607
  %v623 = vpack.c.b16 %v610, %v609
  %v624 = vpack.c.b16 %v612, %v611
  %v625 = vpack.c.b16 %v614, %v613
  %v626 = vpack.c.b16 %v616, %v615
  %v627 = vpack.c.b16 %v618, %v617
  %v628 = vpack.c.b16 %v620, %v619
  %637 = vmatprep.subr.bf16.mxu0 0
  %638 = vmatpush1.bf16.msra.mxu0 %v621
  %639 = vmatprep.subr.bf16.mxu0 0
  %640 = vmatpush1.bf16.msra.mxu0 %v622
  %641 = vmatprep.subr.bf16.mxu0 0
  %642 = vmatpush1.bf16.msra.mxu0 %v623
  %643 = vmatprep.subr.bf16.mxu0 0
  %644 = vmatpush1.bf16.msra.mxu0 %v624
  %645 = vmatprep.subr.bf16.mxu0 0
  %646 = vmatpush1.bf16.msra.mxu0 %v625
  %647 = vmatprep.subr.bf16.mxu0 0
  %648 = vmatpush1.bf16.msra.mxu0 %v626
  %649 = vmatprep.subr.bf16.mxu0 0
  %650 = vmatpush1.bf16.msra.mxu0 %v627
  %651 = vmatprep.subr.bf16.mxu0 0
  %652 = vmatpush1.bf16.msra.mxu0 %v628
  %653 = vmatprep.subr.bf16.mxu0 0
  %654 = vmatpush1.bf16.msra.mxu0 0
  %655 = vmatprep.subr.bf16.mxu0 0
  %656 = vmatpush1.bf16.msra.mxu0 0
  %657 = vmatprep.subr.bf16.mxu0 0
  %658 = vmatpush1.bf16.msra.mxu0 0
  %659 = vmatprep.subr.bf16.mxu0 0
  %660 = vmatpush1.bf16.msra.mxu0 0
  %661 = vmatprep.subr.bf16.mxu0 0
  %662 = vmatpush1.bf16.msra.mxu0 0
  %663 = vmatprep.subr.bf16.mxu0 0
  %664 = vmatpush1.bf16.msra.mxu0 0
  %665 = vmatprep.subr.bf16.mxu0 0
  %666 = vmatpush1.bf16.msra.mxu0 0
  %667 = vmatprep.subr.bf16.mxu0 0
  %668 = vmatpush1.bf16.msra.mxu0 0
  %669 = vmatprep.mubr.bf16.mxu0 0
  %670 = vmatmul.mubr.bf16.gmra.mrb[0].mxu0 %v553
  %v671 = vpop.f32.mrb[0].mxu0
  %v672 = vadd.f32 %v587, %v671
  %v673 = vpop.f32.mrb[0].mxu0
  %v674 = vpop.f32.mrb[0].mxu0
  %v675 = vadd.f32 %v587, %v674
  %v676 = vpop.f32.mrb[0].mxu0
  %677 = vmatprep.mubr.bf16.mxu0 0
  %678 = vmatmul.mubr.bf16.gmra.mrb[0].mxu0 %v554
  %v679 = vpop.f32.mrb[0].mxu0
  %v680 = vadd.f32 %v587, %v679
  %v681 = vpop.f32.mrb[0].mxu0
  %v682 = vpop.f32.mrb[0].mxu0
  %v683 = vadd.f32 %v587, %v682
  %v684 = vpop.f32.mrb[0].mxu0
  %685 = vmatprep.mubr.bf16.mxu0 0
  %686 = vmatmul.mubr.bf16.gmra.mrb[0].mxu0 %v555
  %v687 = vpop.f32.mrb[0].mxu0
  %v688 = vadd.f32 %v587, %v687
  %v689 = vpop.f32.mrb[0].mxu0
  %v690 = vpop.f32.mrb[0].mxu0
  %v691 = vadd.f32 %v587, %v690
  %v692 = vpop.f32.mrb[0].mxu0
  %693 = vmatprep.mubr.bf16.mxu0 0
  %694 = vmatmul.mubr.bf16.gmra.mrb[0].mxu0 %v556
  %v695 = vpop.f32.mrb[0].mxu0
  %v696 = vadd.f32 %v587, %v695
  %v697 = vpop.f32.mrb[0].mxu0
  %v698 = vpop.f32.mrb[0].mxu0
  %v699 = vadd.f32 %v587, %v698
  %v700 = vpop.f32.mrb[0].mxu0
  %701 = vmatprep.mubr.bf16.mxu0 0
  %702 = vmatmul.mubr.bf16.gmra.mrb[0].mxu0 %v557
  %v703 = vpop.f32.mrb[0].mxu0
  %v704 = vadd.f32 %v587, %v703
  %v705 = vpop.f32.mrb[0].mxu0
  %v706 = vpop.f32.mrb[0].mxu0
  %v707 = vadd.f32 %v587, %v706
  %v708 = vpop.f32.mrb[0].mxu0
  %709 = vmatprep.mubr.bf16.mxu0 0
  %710 = vmatmul.mubr.bf16.gmra.mrb[0].mxu0 %v558
  %v711 = vpop.f32.mrb[0].mxu0
  %v712 = vadd.f32 %v587, %v711
  %v713 = vpop.f32.mrb[0].mxu0
  %v714 = vpop.f32.mrb[0].mxu0
  %v715 = vadd.f32 %v587, %v714
  %v716 = vpop.f32.mrb[0].mxu0
  %717 = vmatprep.mubr.bf16.mxu0 0
  %718 = vmatmul.mubr.bf16.gmra.mrb[0].mxu0 %v559
  %v719 = vpop.f32.mrb[0].mxu0
  %v720 = vadd.f32 %v587, %v719
  %v721 = vpop.f32.mrb[0].mxu0
  %v722 = vpop.f32.mrb[0].mxu0
  %v723 = vadd.f32 %v587, %v722
  %v724 = vpop.f32.mrb[0].mxu0
  %725 = vmatprep.mubr.bf16.mxu0 0
  %726 = vmatmul.mubr.bf16.gmra.mrb[0].mxu0 %v560
  %v727 = vpop.f32.mrb[0].mxu0
  %v728 = vadd.f32 %v587, %v727
  %v729 = vpop.f32.mrb[0].mxu0
  %v730 = vpop.f32.mrb[0].mxu0
  %v731 = vadd.f32 %v587, %v730
  %v732 = vpop.f32.mrb[0].mxu0
  %733 = vmatprep.mubr.bf16.mxu0 0
  %734 = vmatmul.mubr.bf16.gmra.mrb[0].mxu0 %v561
  %v735 = vpop.f32.mrb[0].mxu0
  %v736 = vadd.f32 %v587, %v735
  %v737 = vpop.f32.mrb[0].mxu0
  %v738 = vpop.f32.mrb[0].mxu0
  %v739 = vadd.f32 %v587, %v738
  %v740 = vpop.f32.mrb[0].mxu0
  %741 = vmatprep.mubr.bf16.mxu0 0
  %742 = vmatmul.mubr.bf16.gmra.mrb[0].mxu0 %v562
  %v743 = vpop.f32.mrb[0].mxu0
  %v744 = vadd.f32 %v587, %v743
  %v745 = vpop.f32.mrb[0].mxu0
  %v746 = vpop.f32.mrb[0].mxu0
  %v747 = vadd.f32 %v587, %v746
  %v748 = vpop.f32.mrb[0].mxu0
  %749 = vmatprep.mubr.bf16.mxu0 0
  %750 = vmatmul.mubr.bf16.gmra.mrb[0].mxu0 %v563
  %v751 = vpop.f32.mrb[0].mxu0
  %v752 = vadd.f32 %v587, %v751
  %v753 = vpop.f32.mrb[0].mxu0
  %v754 = vpop.f32.mrb[0].mxu0
  %v755 = vadd.f32 %v587, %v754
  %v756 = vpop.f32.mrb[0].mxu0
  %757 = vmatprep.mubr.bf16.mxu0 0
  %758 = vmatmul.mubr.bf16.gmra.mrb[0].mxu0 %v564
  %v759 = vpop.f32.mrb[0].mxu0
  %v760 = vadd.f32 %v587, %v759
  %v761 = vpop.f32.mrb[0].mxu0
  %v762 = vpop.f32.mrb[0].mxu0
  %v763 = vadd.f32 %v587, %v762
  %v764 = vpop.f32.mrb[0].mxu0
  %765 = vmatprep.mubr.bf16.mxu0 0
  %766 = vmatmul.mubr.bf16.gmra.mrb[0].mxu0 %v565
  %v767 = vpop.f32.mrb[0].mxu0
  %v768 = vadd.f32 %v587, %v767
  %v769 = vpop.f32.mrb[0].mxu0
  %v770 = vpop.f32.mrb[0].mxu0
  %v771 = vadd.f32 %v587, %v770
  %v772 = vpop.f32.mrb[0].mxu0
  %773 = vdwg.mxu0
  %v774 = vmax.f32 %v672, 0.0
  %v775 = vmax.f32 %v675, 0.0
  %v776 = vmax.f32 %v680, 0.0
  %v777 = vmax.f32 %v683, 0.0
  %v778 = vmax.f32 %v688, 0.0
  %v779 = vmax.f32 %v691, 0.0
  %v780 = vmax.f32 %v696, 0.0
  %v781 = vmax.f32 %v699, 0.0
  %v782 = vmax.f32 %v704, 0.0
  %v783 = vmax.f32 %v707, 0.0
  %v784 = vmax.f32 %v712, 0.0
  %v785 = vmax.f32 %v715, 0.0
  %v786 = vmax.f32 %v720, 0.0
  %v787 = vmax.f32 %v723, 0.0
  %v788 = vmax.f32 %v728, 0.0
  %v789 = vmax.f32 %v731, 0.0
  %v790 = vmax.f32 %v736, 0.0
  %v791 = vmax.f32 %v739, 0.0
  %v792 = vmax.f32 %v744, 0.0
  %v793 = vmax.f32 %v747, 0.0
  %v794 = vmax.f32 %v752, 0.0
  %v795 = vmax.f32 %v755, 0.0
  %v796 = vmax.f32 %v760, 0.0
  %v797 = vmax.f32 %v763, 0.0
  %v798 = vmax.f32 %v768, 0.0
  %v799 = vmax.f32 %v771, 0.0
  %v800 = vpack.c.bf16 %v775, %v774
  %v801 = vpack.c.bf16 %v777, %v776
  %v802 = vpack.c.bf16 %v779, %v778
  %v803 = vpack.c.bf16 %v781, %v780
  %v804 = vpack.c.bf16 %v783, %v782
  %v805 = vpack.c.bf16 %v785, %v784
  %v806 = vpack.c.bf16 %v787, %v786
  %v807 = vpack.c.bf16 %v789, %v788
  %v808 = vpack.c.bf16 %v791, %v790
  %v809 = vpack.c.bf16 %v793, %v792
  %v810 = vpack.c.bf16 %v795, %v794
  %v811 = vpack.c.bf16 %v797, %v796
  %v812 = vpack.c.bf16 %v799, %v798
  %v813 = vld [vmem:[%s7] sm:$0xf]
  %v814 = vld [vmem:[%s7 + $0x4] sm:$0xf]
  %v815 = vld [vmem:[%s7 + $0x8] sm:$0xf]
  %v816 = vld [vmem:[%s7 + $0xc] sm:$0xf]
  %v817 = vld [vmem:[%s7 + $0x10] sm:$0xf]
  %v818 = vld [vmem:[%s7 + $0x14] sm:$0xf]
  %v819 = vld [vmem:[%s7 + $0x18] sm:$0xf]
  %v820 = vld [vmem:[%s7 + $0x1c] sm:$0xf]
  %v821 = vld [vmem:[%s8] sm:$0x1]
  %v823 = vlaneseq
  %v824 = vshrl.u32 %v823, 7
  %v825 = vsub.s32 0, %v824
  %v826 = vrot.slane %v821, %v825
  %v836 = vunpack.c.l.b16 %v813
  %v837 = vunpack.c.l.b16 %v814
  %v838 = vunpack.c.l.b16 %v815
  %v839 = vunpack.c.l.b16 %v816
  %v840 = vunpack.c.l.b16 %v817
  %v841 = vunpack.c.l.b16 %v818
  %v842 = vunpack.c.l.b16 %v819
  %v843 = vunpack.c.l.b16 %v820
  %v844 = vpack.c.b16 %v837, %v836
  %v845 = vpack.c.b16 %v839, %v838
  %v846 = vpack.c.b16 %v841, %v840
  %v847 = vpack.c.b16 %v843, %v842
  %v853 = vsel %vm350, %v800, 0
  %v856 = vsel %vm350, %v801, 0
  %v859 = vsel %vm350, %v802, 0
  %v862 = vsel %vm350, %v803, 0
  %v865 = vsel %vm350, %v804, 0
  %v868 = vsel %vm350, %v805, 0
  %v871 = vsel %vm350, %v806, 0
  %v874 = vsel %vm350, %v807, 0
  %v877 = vsel %vm350, %v808, 0
  %v880 = vsel %vm350, %v809, 0
  %v883 = vsel %vm350, %v810, 0
  %v886 = vsel %vm350, %v811, 0
  %v889 = vsel %vm350, %v812, 0
  %891 = vmatprep.subr.bf16.mxu0 0
  %892 = vmatpush1.bf16.msra.mxu0 %v844
  %893 = vmatprep.subr.bf16.mxu0 0
  %894 = vmatpush1.bf16.msra.mxu0 %v845
  %895 = vmatprep.subr.bf16.mxu0 0
  %896 = vmatpush1.bf16.msra.mxu0 %v846
  %897 = vmatprep.subr.bf16.mxu0 0
  %898 = vmatpush1.bf16.msra.mxu0 %v847
  %899 = vmatprep.subr.bf16.mxu0 0
  %900 = vmatpush1.bf16.msra.mxu0 0
  %901 = vmatprep.subr.bf16.mxu0 0
  %902 = vmatpush1.bf16.msra.mxu0 0
  %903 = vmatprep.subr.bf16.mxu0 0
  %904 = vmatpush1.bf16.msra.mxu0 0
  %905 = vmatprep.subr.bf16.mxu0 0
  %906 = vmatpush1.bf16.msra.mxu0 0
  %907 = vmatprep.subr.bf16.mxu0 0
  %908 = vmatpush1.bf16.msra.mxu0 0
  %909 = vmatprep.subr.bf16.mxu0 0
  %910 = vmatpush1.bf16.msra.mxu0 0
  %911 = vmatprep.subr.bf16.mxu0 0
  %912 = vmatpush1.bf16.msra.mxu0 0
  %913 = vmatprep.subr.bf16.mxu0 0
  %914 = vmatpush1.bf16.msra.mxu0 0
  %915 = vmatprep.subr.bf16.mxu0 0
  %916 = vmatpush1.bf16.msra.mxu0 0
  %917 = vmatprep.subr.bf16.mxu0 0
  %918 = vmatpush1.bf16.msra.mxu0 0
  %919 = vmatprep.subr.bf16.mxu0 0
  %920 = vmatpush1.bf16.msra.mxu0 0
  %921 = vmatprep.subr.bf16.mxu0 0
  %922 = vmatpush1.bf16.msra.mxu0 0
  %923 = vmatprep.mubr.bf16.mxu0 0
  %924 = vmatmul.mubr.bf16.gmra.mrb[0].mxu0 %v853
  %v925 = vpop.f32.mrb[0].mxu0
  %v926 = vadd.f32 %v826, %v925
  %v927 = vpop.f32.mrb[0].mxu0
  %v928 = vpop.f32.mrb[0].mxu0
  %v929 = vadd.f32 %v826, %v928
  %v930 = vpop.f32.mrb[0].mxu0
  %931 = vmatprep.mubr.bf16.mxu0 0
  %932 = vmatmul.mubr.bf16.gmra.mrb[0].mxu0 %v856
  %v933 = vpop.f32.mrb[0].mxu0
  %v934 = vadd.f32 %v826, %v933
  %v935 = vpop.f32.mrb[0].mxu0
  %v936 = vpop.f32.mrb[0].mxu0
  %v937 = vadd.f32 %v826, %v936
  %v938 = vpop.f32.mrb[0].mxu0
  %939 = vmatprep.mubr.bf16.mxu0 0
  %940 = vmatmul.mubr.bf16.gmra.mrb[0].mxu0 %v859
  %v941 = vpop.f32.mrb[0].mxu0
  %v942 = vadd.f32 %v826, %v941
  %v943 = vpop.f32.mrb[0].mxu0
  %v944 = vpop.f32.mrb[0].mxu0
  %v945 = vadd.f32 %v826, %v944
  %v946 = vpop.f32.mrb[0].mxu0
  %947 = vmatprep.mubr.bf16.mxu0 0
  %948 = vmatmul.mubr.bf16.gmra.mrb[0].mxu0 %v862
  %v949 = vpop.f32.mrb[0].mxu0
  %v950 = vadd.f32 %v826, %v949
  %v951 = vpop.f32.mrb[0].mxu0
  %v952 = vpop.f32.mrb[0].mxu0
  %v953 = vadd.f32 %v826, %v952
  %v954 = vpop.f32.mrb[0].mxu0
  %955 = vmatprep.mubr.bf16.mxu0 0
  %956 = vmatmul.mubr.bf16.gmra.mrb[0].mxu0 %v865
  %v957 = vpop.f32.mrb[0].mxu0
  %v958 = vadd.f32 %v826, %v957
  %v959 = vpop.f32.mrb[0].mxu0
  %v960 = vpop.f32.mrb[0].mxu0
  %v961 = vadd.f32 %v826, %v960
  %v962 = vpop.f32.mrb[0].mxu0
  %963 = vmatprep.mubr.bf16.mxu0 0
  %964 = vmatmul.mubr.bf16.gmra.mrb[0].mxu0 %v868
  %v965 = vpop.f32.mrb[0].mxu0
  %v966 = vadd.f32 %v826, %v965
  %v967 = vpop.f32.mrb[0].mxu0
  %v968 = vpop.f32.mrb[0].mxu0
  %v969 = vadd.f32 %v826, %v968
  %v970 = vpop.f32.mrb[0].mxu0
  %971 = vmatprep.mubr.bf16.mxu0 0
  %972 = vmatmul.mubr.bf16.gmra.mrb[0].mxu0 %v871
  %v973 = vpop.f32.mrb[0].mxu0
  %v974 = vadd.f32 %v826, %v973
  %v975 = vpop.f32.mrb[0].mxu0
  %v976 = vpop.f32.mrb[0].mxu0
  %v977 = vadd.f32 %v826, %v976
  %v978 = vpop.f32.mrb[0].mxu0
  %979 = vmatprep.mubr.bf16.mxu0 0
  %980 = vmatmul.mubr.bf16.gmra.mrb[0].mxu0 %v874
  %v981 = vpop.f32.mrb[0].mxu0
  %v982 = vadd.f32 %v826, %v981
  %v983 = vpop.f32.mrb[0].mxu0
  %v984 = vpop.f32.mrb[0].mxu0
  %v985 = vadd.f32 %v826, %v984
  %v986 = vpop.f32.mrb[0].mxu0
  %987 = vmatprep.mubr.bf16.mxu0 0
  %988 = vmatmul.mubr.bf16.gmra.mrb[0].mxu0 %v877
  %v989 = vpop.f32.mrb[0].mxu0
  %v990 = vadd.f32 %v826, %v989
  %v991 = vpop.f32.mrb[0].mxu0
  %v992 = vpop.f32.mrb[0].mxu0
  %v993 = vadd.f32 %v826, %v992
  %v994 = vpop.f32.mrb[0].mxu0
  %995 = vmatprep.mubr.bf16.mxu0 0
  %996 = vmatmul.mubr.bf16.gmra.mrb[0].mxu0 %v880
  %v997 = vpop.f32.mrb[0].mxu0
  %v998 = vadd.f32 %v826, %v997
  %v999 = vpop.f32.mrb[0].mxu0
  %v1000 = vpop.f32.mrb[0].mxu0
  %v1001 = vadd.f32 %v826, %v1000
  %v1002 = vpop.f32.mrb[0].mxu0
  %1003 = vmatprep.mubr.bf16.mxu0 0
  %1004 = vmatmul.mubr.bf16.gmra.mrb[0].mxu0 %v883
  %v1005 = vpop.f32.mrb[0].mxu0
  %v1006 = vadd.f32 %v826, %v1005
  %v1007 = vpop.f32.mrb[0].mxu0
  %v1008 = vpop.f32.mrb[0].mxu0
  %v1009 = vadd.f32 %v826, %v1008
  %v1010 = vpop.f32.mrb[0].mxu0
  %1011 = vmatprep.mubr.bf16.mxu0 0
  %1012 = vmatmul.mubr.bf16.gmra.mrb[0].mxu0 %v886
  %v1013 = vpop.f32.mrb[0].mxu0
  %v1014 = vadd.f32 %v826, %v1013
  %v1015 = vpop.f32.mrb[0].mxu0
  %v1016 = vpop.f32.mrb[0].mxu0
  %v1017 = vadd.f32 %v826, %v1016
  %v1018 = vpop.f32.mrb[0].mxu0
  %1019 = vmatprep.mubr.bf16.mxu0 0
  %1020 = vmatmul.mubr.bf16.gmra.mrb[0].mxu0 %v889
  %v1021 = vpop.f32.mrb[0].mxu0
  %v1022 = vadd.f32 %v826, %v1021
  %v1023 = vpop.f32.mrb[0].mxu0
  %v1024 = vpop.f32.mrb[0].mxu0
  %v1025 = vadd.f32 %v826, %v1024
  %v1026 = vpop.f32.mrb[0].mxu0
  %1027 = vdwg.mxu0
  %v1028 = vpack.c.bf16 %v929, %v926
  %v1029 = vpack.c.bf16 %v937, %v934
  %v1030 = vpack.c.bf16 %v945, %v942
  %v1031 = vpack.c.bf16 %v953, %v950
  %v1032 = vpack.c.bf16 %v961, %v958
  %v1033 = vpack.c.bf16 %v969, %v966
  %v1034 = vpack.c.bf16 %v977, %v974
  %v1035 = vpack.c.bf16 %v985, %v982
  %v1036 = vpack.c.bf16 %v993, %v990
  %v1037 = vpack.c.bf16 %v1001, %v998
  %v1038 = vpack.c.bf16 %v1009, %v1006
  %v1039 = vpack.c.bf16 %v1017, %v1014
  %v1040 = vpack.c.bf16 %v1025, %v1022
  %v1054 = vunpack.c.l.b16 %v1028
  %v1055 = vunpack.c.h.b16 %v1028
  %v1056 = vunpack.c.l.b16 %v1029
  %v1057 = vunpack.c.h.b16 %v1029
  %v1058 = vunpack.c.l.b16 %v1030
  %v1059 = vunpack.c.h.b16 %v1030
  %v1060 = vunpack.c.l.b16 %v1031
  %v1061 = vunpack.c.h.b16 %v1031
  %v1062 = vunpack.c.l.b16 %v1032
  %v1063 = vunpack.c.h.b16 %v1032
  %v1064 = vunpack.c.l.b16 %v1033
  %v1065 = vunpack.c.h.b16 %v1033
  %v1066 = vunpack.c.l.b16 %v1034
  %v1067 = vunpack.c.h.b16 %v1034
  %v1068 = vunpack.c.l.b16 %v1035
  %v1069 = vunpack.c.h.b16 %v1035
  %v1070 = vunpack.c.l.b16 %v1036
  %v1071 = vunpack.c.h.b16 %v1036
  %v1072 = vunpack.c.l.b16 %v1037
  %v1073 = vunpack.c.h.b16 %v1037
  %v1074 = vunpack.c.l.b16 %v1038
  %v1075 = vunpack.c.h.b16 %v1038
  %v1076 = vunpack.c.l.b16 %v1039
  %v1077 = vunpack.c.h.b16 %v1039
  %v1078 = vunpack.c.l.b16 %v1040
  %v1079 = vunpack.c.h.b16 %v1040
  %v1080 = vpack.c.b16 %v1054, %v1054
  %v1081 = vpack.c.b16 %v1055, %v1055
  %v1082 = vpack.c.b16 %v1056, %v1056
  %v1083 = vpack.c.b16 %v1057, %v1057
  %v1084 = vpack.c.b16 %v1058, %v1058
  %v1085 = vpack.c.b16 %v1059, %v1059
  %v1086 = vpack.c.b16 %v1060, %v1060
  %v1087 = vpack.c.b16 %v1061, %v1061
  %v1088 = vpack.c.b16 %v1062, %v1062
  %v1089 = vpack.c.b16 %v1063, %v1063
  %v1090 = vpack.c.b16 %v1064, %v1064
  %v1091 = vpack.c.b16 %v1065, %v1065
  %v1092 = vpack.c.b16 %v1066, %v1066
  %v1093 = vpack.c.b16 %v1067, %v1067
  %v1094 = vpack.c.b16 %v1068, %v1068
  %v1095 = vpack.c.b16 %v1069, %v1069
  %v1096 = vpack.c.b16 %v1070, %v1070
  %v1097 = vpack.c.b16 %v1071, %v1071
  %v1098 = vpack.c.b16 %v1072, %v1072
  %v1099 = vpack.c.b16 %v1073, %v1073
  %v1100 = vpack.c.b16 %v1074, %v1074
  %v1101 = vpack.c.b16 %v1075, %v1075
  %v1102 = vpack.c.b16 %v1076, %v1076
  %v1103 = vpack.c.b16 %v1077, %v1077
  %v1104 = vpack.c.b16 %v1078, %v1078
  %v1105 = vpack.c.b16 %v1079, %v1079
  %1132 = vst [vmem:[%s9] sm:$0xf] %v1080
  %1133 = vst [vmem:[%s9 + $0x4] sm:$0xf] %v1081
  %1134 = vst [vmem:[%s9 + $0x8] sm:$0xf] %v1082
  %1135 = vst [vmem:[%s9 + $0xc] sm:$0xf] %v1083
  %1136 = vst [vmem:[%s9 + $0x10] sm:$0xf] %v1084
  %1137 = vst [vmem:[%s9 + $0x14] sm:$0xf] %v1085
  %1138 = vst [vmem:[%s9 + $0x18] sm:$0xf] %v1086
  %1139 = vst [vmem:[%s9 + $0x1c] sm:$0xf] %v1087
  %1140 = vst [vmem:[%s9 + $0x20] sm:$0xf] %v1088
  %1141 = vst [vmem:[%s9 + $0x24] sm:$0xf] %v1089
  %1142 = vst [vmem:[%s9 + $0x28] sm:$0xf] %v1090
  %1143 = vst [vmem:[%s9 + $0x2c] sm:$0xf] %v1091
  %1144 = vst [vmem:[%s9 + $0x30] sm:$0xf] %v1092
  %1145 = vst [vmem:[%s9 + $0x34] sm:$0xf] %v1093
  %1146 = vst [vmem:[%s9 + $0x38] sm:$0xf] %v1094
  %1147 = vst [vmem:[%s9 + $0x3c] sm:$0xf] %v1095
  %1148 = vst [vmem:[%s9 + $0x40] sm:$0xf] %v1096
  %1149 = vst [vmem:[%s9 + $0x44] sm:$0xf] %v1097
  %1150 = vst [vmem:[%s9 + $0x48] sm:$0xf] %v1098
  %1151 = vst [vmem:[%s9 + $0x4c] sm:$0xf] %v1099
  %1152 = vst [vmem:[%s9 + $0x50] sm:$0xf] %v1100
  %1153 = vst [vmem:[%s9 + $0x54] sm:$0xf] %v1101
  %1154 = vst [vmem:[%s9 + $0x58] sm:$0xf] %v1102
  %1155 = vst [vmem:[%s9 + $0x5c] sm:$0xf] %v1103
  %1156 = vst [vmem:[%s9 + $0x60] sm:$0xf] %v1104
  %1157 = vst [vmem:[%s9 + $0x64] sm:$0xf] %v1105
  // Predicated region
  $region38: #{mlp_forward.1} parent=0 // pred_check
    _
  $region39: #{mlp_forward.1} parent=0 // pred_check_branch
    %1159 = sbr.rel (0) target = $region41
  $region40: #{mlp_forward.1} parent=0 // pred_region
    _
  $region41: #{mlp_forward.1} parent=0 // pred_fallthru
    _
  // Predicated region
  $region42: #{mlp_forward.1} parent=0 // pred_check
    _
  $region43: #{mlp_forward.1} parent=0 // pred_check_branch
    %1161 = sbr.rel (0) target = $region45
  $region44: #{mlp_forward.1} parent=0 // pred_region
    _
  $region45: #{mlp_forward.1} parent=0 // pred_fallthru
    _

</llo_original>
